<compile_context>
chip_gen: v5e
topology: v5e:2x2
jax: 0.10.0
libtpu: 0.0.40
codegen_flags: <defaults>
</compile_context>

<pallas_src>
import functools
import math

import jax
import jax.numpy as jnp
from jax.experimental import pallas as pl
from jax.experimental.pallas import tpu as pltpu

EPS = 0.001
SOFTPLUS_THRESHOLD = 20.0      # matches F.softplus defaults (beta=1, threshold=20)

_VMEM_LIMIT_BYTES = 48 * 1024 * 1024   # comfortably under v7x's 64 MiB physical VMEM
_DEFAULT_BLOCK_ROWS = 16384            # x rows per grid step (sweep 8k-32k)
_MIN_ROWS_FOR_TWO_STEPS = 2048         # force >=2 grid steps above this (megacore)


def _round_up(x: int, m: int) -> int:
    return ((x + m - 1) // m) * m


def _beta_policy_kernel(x_ref, wp_ref, bp_ref, out_ref):
    # x_ref:  [TP, P*F]    packed input rows (native dtype), pipelined over batch
    # wp_ref: [P*F, P*2A]  block-diagonal weight (compute dtype), resident
    # bp_ref: [1,  P*2A]   tiled bias (f32), resident
    # out_ref:[TP, P*2A]   = softplus(x @ W^T + b) + eps, lane-dense packed rows
    xv = x_ref[...].astype(wp_ref.dtype)           # in-kernel cast (bf16 by default)
    y = jnp.dot(xv, wp_ref[...], preferred_element_type=jnp.float32)
    y = y + bp_ref[...]
    # PyTorch softplus: y if y > threshold else log1p(exp(y)); clamp the
    # unselected branch so exp never overflows.
    sp = jnp.where(
        y > SOFTPLUS_THRESHOLD,
        y,
        jnp.log1p(jnp.exp(jnp.minimum(y, SOFTPLUS_THRESHOLD))),
    )
    out_ref[...] = (sp + EPS).astype(out_ref.dtype)


def prepare_beta_policy_params(weight, bias, compute_dtype=jnp.bfloat16, pack=None):
    """One-time weight prep (hoisted out of the forward path).

    weight: [2A, F] f32 (PyTorch nn.Linear layout; outputs interleaved a0,b0,a1,b1,...)
    bias:   [2A]    f32

    Returns (wp, bp, pack):
      wp:  [pack*F, pack*2A] block-diagonal kron(I_pack, W^T) in `compute_dtype`,
           output columns de-interleaved to [alpha_0..alpha_{A-1} | beta_0..beta_{A-1}]
           within each packed group;
      bp:  [1, pack*2A] f32 bias tiled to match;
      pack: number of batch rows packed into one lane-dense output row.
    """
    two_a, in_features = weight.shape
    assert two_a % 2 == 0
    if pack is None:
        # Smallest pack making the packed output row a multiple of 128 lanes.
        # (For very wide layers pass pack explicitly to bound the kron size.)
        pack = 128 // math.gcd(two_a, 128)
    # column 2a -> alpha_a, column 2a+1 -> beta_a  =>  [alphas | betas]
    perm = jnp.concatenate([jnp.arange(0, two_a, 2), jnp.arange(1, two_a, 2)])
    wt = jnp.transpose(weight[perm, :]).astype(jnp.float32)            # [F, 2A]
    wp = jnp.kron(jnp.eye(pack, dtype=jnp.float32), wt).astype(compute_dtype)
    bp = jnp.tile(bias[perm].astype(jnp.float32), pack).reshape(1, pack * two_a)
    return wp, bp, pack


@functools.partial(jax.jit, static_argnames=("block_rows", "out_dtype"))
def beta_policy_forward(x, wp, bp, *, block_rows=_DEFAULT_BLOCK_ROWS,
                        out_dtype=jnp.float32):
    """Returns (alpha, beta): the Beta(concentration0, concentration1) parameters.

    x:      [B, F] any float dtype (cast to wp.dtype inside the kernel)
    wp, bp: prepared by prepare_beta_policy_params
    """
    B, F = x.shape
    pack = wp.shape[0] // F
    two_a = wp.shape[1] // pack
    action_dim = two_a // 2

    # Pack `pack` consecutive rows into one lane-dense row.  The reshape is a
    # free row-major metadata change; the zero-pad copy only happens when
    # B % pack != 0 (keeps garbage out of valid packed rows).
    padded_b = _round_up(B, pack)
    xp = x if padded_b == B else jnp.pad(x, ((0, padded_b - B), (0, 0)))
    rows = padded_b // pack
    xp = xp.reshape(rows, pack * F)

    # Packed-row tile: big enough to amortize per-step overhead, a multiple of
    # 32 (sublane-safe for f32/bf16 inputs), and >=2 grid steps for mid/large
    # batches so both v7x TensorCores get work.  Tiny batches use one
    # full-extent block (always a legal block shape).
    target = max(32, (block_rows // pack) // 32 * 32)
    if rows > target:
        tile = target
    elif padded_b >= _MIN_ROWS_FOR_TWO_STEPS:
        tile = _round_up(pl.cdiv(rows, 2), 32)
    else:
        tile = rows
    grid = (pl.cdiv(rows, tile),)

    out = pl.pallas_call(
        _beta_policy_kernel,
        out_shape=jax.ShapeDtypeStruct((rows, pack * two_a), out_dtype),
        grid=grid,
        in_specs=[
            pl.BlockSpec((tile, pack * F), lambda i: (i, 0)),           # x, pipelined
            pl.BlockSpec((pack * F, pack * two_a), lambda i: (0, 0)),   # weight, resident
            pl.BlockSpec((1, pack * two_a), lambda i: (0, 0)),          # bias, resident
        ],
        out_specs=pl.BlockSpec((tile, pack * two_a), lambda i: (i, 0)),
        compiler_params=pltpu.CompilerParams(
            dimension_semantics=("parallel",),
            vmem_limit_bytes=_VMEM_LIMIT_BYTES,
        ),
    )(xp, wp, bp)

    out = out.reshape(padded_b, two_a)[:B]   # unpack: free reshape + small slice
    alpha = out[:, :action_dim]              # concentration0
    beta = out[:, action_dim:]               # concentration1
    return alpha, beta


def _reference(x, weight, bias):
    """Pure-JAX f32 reference matching the PyTorch module."""
    y = x.astype(jnp.float32) @ weight.T + bias
    sp = jax.nn.softplus(y) + EPS
    p = sp.reshape(x.shape[0], -1, 2)
    return p[..., 0], p[..., 1]


if __name__ == "__main__":
    key = jax.random.PRNGKey(0)
    batch = 2
    input_features = 32
    action_dim = 4

    k_x, k_w, k_b, k_x2, k_x3 = jax.random.split(key, 5)
    # Deterministic PyTorch-style Linear init: U(-1/sqrt(in), 1/sqrt(in))
    bound = 1.0 / (input_features ** 0.5)
    weight = jax.random.uniform(
        k_w, (2 * action_dim, input_features), jnp.float32, -bound, bound
    )
    bias = jax.random.uniform(k_b, (2 * action_dim,), jnp.float32, -bound, bound)
    x = jax.random.normal(k_x, (batch, input_features), jnp.float32)

    # --- bf16-fed MXU path (default / recommended) ---
    wp, bp, _ = prepare_beta_policy_params(weight, bias, jnp.bfloat16)
    alpha, beta = beta_policy_forward(x, wp, bp)
    jax.block_until_ready((alpha, beta))
    a_ref, b_ref = _reference(x, weight, bias)
    assert alpha.shape == (batch, action_dim) and beta.shape == (batch, action_dim)
    assert jnp.allclose(alpha, a_ref, atol=2e-2, rtol=2e-2), "alpha mismatch (bf16)"
    assert jnp.allclose(beta, b_ref, atol=2e-2, rtol=2e-2), "beta mismatch (bf16)"

    # --- f32 path (for concentration-sensitive policies) ---
    wp32, bp32, _ = prepare_beta_policy_params(weight, bias, jnp.float32)
    a32, b32 = beta_policy_forward(x, wp32, bp32)
    jax.block_until_ready((a32, b32))
    assert jnp.allclose(a32, a_ref, atol=1e-3, rtol=1e-3), "alpha mismatch (f32)"
    assert jnp.allclose(b32, b_ref, atol=1e-3, rtol=1e-3), "beta mismatch (f32)"

    # --- pack-aligned batch: no wrapper pad, 2 parallel grid steps ---
    xb = jax.random.normal(k_x2, (4096, input_features), jnp.float32)
    a_b, b_b = beta_policy_forward(xb, wp, bp)
    jax.block_until_ready((a_b, b_b))
    a_rb, b_rb = _reference(xb, weight, bias)
    assert a_b.shape == (4096, action_dim)
    assert jnp.allclose(a_b, a_rb, atol=2e-2, rtol=2e-2), "alpha mismatch (4096)"
    assert jnp.allclose(b_b, b_rb, atol=2e-2, rtol=2e-2), "beta mismatch (4096)"

    # --- ragged batch: exercises pad-to-pack + ragged (masked) last grid block ---
    xr = jax.random.normal(k_x3, (5000, input_features), jnp.float32)
    a_r, b_r = beta_policy_forward(xr, wp, bp)
    jax.block_until_ready((a_r, b_r))
    a_rr, b_rr = _reference(xr, weight, bias)
    assert a_r.shape == (5000, action_dim)
    assert jnp.allclose(a_r, a_rr, atol=2e-2, rtol=2e-2), "alpha mismatch (5000)"
    assert jnp.allclose(b_r, b_rr, atol=2e-2, rtol=2e-2), "beta mismatch (5000)"

    print("KERNEL_OK")
</pallas_src>

<mosaic_0001>
module attributes {stable_mosaic.version = 11 : i64} {
  func.func @_beta_policy_kernel(%arg0: i32, %arg1: memref<1x512xf32, #tpu.memory_space<vmem>>, %arg2: memref<512x128xbf16, #tpu.memory_space<vmem>>, %arg3: memref<1x128xf32, #tpu.memory_space<vmem>>, %arg4: memref<1x128xf32, #tpu.memory_space<vmem>>) attributes {dimension_semantics = [#tpu.dimension_semantics<parallel>], iteration_bounds = array<i64: 1>, scalar_prefetch = 0 : i64, scratch_operands = 0 : i64, tpu.core_type = #tpu.core_type<tc>, window_params = [{transform_indices = @transform_0, window_bounds = array<i64: 1, 512>}, {pipeline_mode = #tpu.pipeline_mode<synchronous>, transform_indices = @transform_1, window_bounds = array<i64: 512, 128>}, {pipeline_mode = #tpu.pipeline_mode<synchronous>, transform_indices = @transform_2, window_bounds = array<i64: 1, 128>}, {transform_indices = @transform_3, window_bounds = array<i64: 1, 128>}]} {
    %c0 = arith.constant 0 : index
    %c0_0 = arith.constant 0 : index
    %0 = vector.load %arg1[%c0, %c0_0] : memref<1x512xf32, #tpu.memory_space<vmem>>, vector<1x512xf32>
    %1 = arith.truncf %0 : vector<1x512xf32> to vector<1x512xbf16>
    %c0_1 = arith.constant 0 : index
    %c0_2 = arith.constant 0 : index
    %2 = vector.load %arg2[%c0_1, %c0_2] : memref<512x128xbf16, #tpu.memory_space<vmem>>, vector<512x128xbf16>
    %cst = arith.constant dense<0.000000e+00> : vector<1x128xf32>
    %3 = tpu.matmul %1, %2, %cst {dimension_numbers = #tpu.dot_dimension_numbers<[1], [0], [0], [1], [0, 0, 1, 1], [], []>} : vector<1x512xbf16>, vector<512x128xbf16>, vector<1x128xf32> -> vector<1x128xf32>
    %c0_3 = arith.constant 0 : index
    %c0_4 = arith.constant 0 : index
    %4 = vector.load %arg3[%c0_3, %c0_4] : memref<1x128xf32, #tpu.memory_space<vmem>>, vector<1x128xf32>
    %5 = arith.addf %3, %4 : vector<1x128xf32>
    %cst_5 = arith.constant 2.000000e+01 : f32
    %6 = vector.broadcast %cst_5 : f32 to vector<1x128xf32>
    %7 = arith.cmpf ogt, %5, %6 : vector<1x128xf32>
    %cst_6 = arith.constant 2.000000e+01 : f32
    %8 = vector.broadcast %cst_6 : f32 to vector<1x128xf32>
    %9 = arith.minimumf %5, %8 : vector<1x128xf32>
    %10 = math.exp %9 : vector<1x128xf32>
    %11 = math.log1p %10 : vector<1x128xf32>
    %12 = arith.select %7, %5, %11 : vector<1x128xi1>, vector<1x128xf32>
    %cst_7 = arith.constant 1.000000e-03 : f32
    %13 = vector.broadcast %cst_7 : f32 to vector<1x128xf32>
    %14 = arith.addf %12, %13 : vector<1x128xf32>
    %c0_8 = arith.constant 0 : index
    %c0_9 = arith.constant 0 : index
    %15 = vector.load %arg4[%c0_8, %c0_9] : memref<1x128xf32, #tpu.memory_space<vmem>>, vector<1x128xf32>
    tpu.vector_store %arg4[%c0_8, %c0_9], %14 {strides = array<i32>} : memref<1x128xf32, #tpu.memory_space<vmem>>, vector<1x128xf32>,
    return
  }
  func.func @transform_0(%arg0: i32) -> (i32, i32) {
    %c0_i32 = arith.constant 0 : i32
    %c0_i32_0 = arith.constant 0 : i32
    return %arg0, %c0_i32 : i32, i32
  }
  func.func @transform_1(%arg0: i32) -> (i32, i32) {
    %c0_i32 = arith.constant 0 : i32
    %c0_i32_0 = arith.constant 0 : i32
    %c0_i32_1 = arith.constant 0 : i32
    return %c0_i32, %c0_i32_0 : i32, i32
  }
  func.func @transform_2(%arg0: i32) -> (i32, i32) {
    %c0_i32 = arith.constant 0 : i32
    %c0_i32_0 = arith.constant 0 : i32
    %c0_i32_1 = arith.constant 0 : i32
    return %c0_i32, %c0_i32_0 : i32, i32
  }
  func.func @transform_3(%arg0: i32) -> (i32, i32) {
    %c0_i32 = arith.constant 0 : i32
    %c0_i32_0 = arith.constant 0 : i32
    return %arg0, %c0_i32 : i32, i32
  }
}

</mosaic_0001>

<llo_original>
// kernel: beta_policy_forward.1
$region0: #{beta_policy_forward.1}
  #allocation0 [shape = 'u32[]', space=smem, size = 0x4, offset = 0x4, fixed_abs, tag = 'smem constant byte address 0x4 - core index']
  #allocation1 [shape = 'u32[72,128]{1,0:T(1,128)}', space=vmem, size = 0x9000, scoped, tag = 'internal scratch']
  %s0 = inlined_call_operand.vmem [shape: f32[1,512], index: 0, kind: input, shape index: {}]
  %s1 = inlined_call_operand.hbm [shape: bf16[512,128], index: 1, kind: input, shape index: {}]
  %s2 = inlined_call_operand.vmem [shape: f32[1,128], index: 2, kind: input, shape index: {}]
  %s3 = inlined_call_operand.vmem [shape: f32[1,128], index: 3, kind: output, shape index: {}]
  %s4 = sld [smem:[#allocation0]]
  $region26: #{beta_policy_forward.1} parent=0
    _
  %s6 = ssub.s32 1, %s4
  %s7 = scalar_select 0, %s6, %s4
  $region1: #{beta_policy_forward.1} parent=0
    #allocation2 [shape = 'u8[131072]{0}', space=vmem, size = 0x20000, scoped, tag = 'input window, operand 1, single buffered']
    #allocation3 [shape = 's32[1]{0}', space=sflag, size = 0x4, scoped, tag = 'scoped memory for beta_policy_forward.1']
    %8 = vsyncpa [#allocation3], 0
    // Predicated region
    $region2: #{beta_policy_forward.1} parent=1 // pred_check
      _
    $region3: #{beta_policy_forward.1} parent=1 // pred_check_branch
      %10 = sbr.rel (0) target = $region5
    $region4: #{beta_policy_forward.1} parent=1 // pred_region
      _
    $region5: #{beta_policy_forward.1} parent=1 // pred_fallthru
      _
    // Predicated region
    $region6: #{beta_policy_forward.1} parent=1 // pred_check
      _
    $region7: #{beta_policy_forward.1} parent=1 // pred_check_branch
      %12 = sbr.rel (0) target = $region9
    $region8: #{beta_policy_forward.1} parent=1 // pred_region
      %14 = vsyncadd [#allocation3], 0
      %s15 = sshll.u32 %s1, 4
      %s16 = int_to_ptr.hbm [resolvable:$true] %s15
      %s17 = sshll.u32 [#allocation2], 4
      %s18 = int_to_ptr.vmem [resolvable:$true] %s17
      %23 = dma.hbm_to_vmem [thread:$0]  %s16, 4096, %s18, [#allocation3], 64, 64, 4
    $region9: #{beta_policy_forward.1} parent=1 // pred_fallthru
      _
    // Predicated region
    $region10: #{beta_policy_forward.1} parent=1 // pred_check
      _
    $region11: #{beta_policy_forward.1} parent=1 // pred_check_branch
      %25 = sbr.rel (0) target = $region13
    $region12: #{beta_policy_forward.1} parent=1 // pred_region
      _
    $region13: #{beta_policy_forward.1} parent=1 // pred_fallthru
      _
    // Predicated region
    $region14: #{beta_policy_forward.1} parent=1 // pred_check
      _
    $region15: #{beta_policy_forward.1} parent=1 // pred_check_branch
      %27 = sbr.rel (0) target = $region17
    $region16: #{beta_policy_forward.1} parent=1 // pred_region
      %29 = dma.done [#allocation3], 4096
    $region17: #{beta_policy_forward.1} parent=1 // pred_fallthru
      _
    %v30 = vld [vmem:[%s0] sm:$0xf]
    %v32 = vperm.slane %v30, 0
    %v33 = vperm.slane %v30, 1
    %v34 = vperm.slane %v30, 2
    %v35 = vperm.slane %v30, 3
    %v40 = vpack.c.bf16 %v32, %v32
    %v41 = vpack.c.bf16 %v33, %v33
    %v42 = vpack.c.bf16 %v34, %v34
    %v43 = vpack.c.bf16 %v35, %v35
    %v44 = vld [vmem:[#allocation2] sm:$0xf]
    %v45 = vld [vmem:[#allocation2 + $0x4] sm:$0xf]
    %v46 = vld [vmem:[#allocation2 + $0x8] sm:$0xf]
    %v47 = vld [vmem:[#allocation2 + $0xc] sm:$0xf]
    %v48 = vld [vmem:[#allocation2 + $0x10] sm:$0xf]
    %v49 = vld [vmem:[#allocation2 + $0x14] sm:$0xf]
    %v50 = vld [vmem:[#allocation2 + $0x18] sm:$0xf]
    %v51 = vld [vmem:[#allocation2 + $0x1c] sm:$0xf]
    %v52 = vld [vmem:[#allocation2 + $0x20] sm:$0xf]
    %v53 = vld [vmem:[#allocation2 + $0x24] sm:$0xf]
    %v54 = vld [vmem:[#allocation2 + $0x28] sm:$0xf]
    %v55 = vld [vmem:[#allocation2 + $0x2c] sm:$0xf]
    %v56 = vld [vmem:[#allocation2 + $0x30] sm:$0xf]
    %v57 = vld [vmem:[#allocation2 + $0x34] sm:$0xf]
    %v58 = vld [vmem:[#allocation2 + $0x38] sm:$0xf]
    %v59 = vld [vmem:[#allocation2 + $0x3c] sm:$0xf]
    %v60 = vld [vmem:[#allocation2 + $0x40] sm:$0xf]
    %v61 = vld [vmem:[#allocation2 + $0x44] sm:$0xf]
    %v62 = vld [vmem:[#allocation2 + $0x48] sm:$0xf]
    %v63 = vld [vmem:[#allocation2 + $0x4c] sm:$0xf]
    %v64 = vld [vmem:[#allocation2 + $0x50] sm:$0xf]
    %v65 = vld [vmem:[#allocation2 + $0x54] sm:$0xf]
    %v66 = vld [vmem:[#allocation2 + $0x58] sm:$0xf]
    %v67 = vld [vmem:[#allocation2 + $0x5c] sm:$0xf]
    %v68 = vld [vmem:[#allocation2 + $0x60] sm:$0xf]
    %v69 = vld [vmem:[#allocation2 + $0x64] sm:$0xf]
    %v70 = vld [vmem:[#allocation2 + $0x68] sm:$0xf]
    %v71 = vld [vmem:[#allocation2 + $0x6c] sm:$0xf]
    %v72 = vld [vmem:[#allocation2 + $0x70] sm:$0xf]
    %v73 = vld [vmem:[#allocation2 + $0x74] sm:$0xf]
    %v74 = vld [vmem:[#allocation2 + $0x78] sm:$0xf]
    %v75 = vld [vmem:[#allocation2 + $0x7c] sm:$0xf]
    %v76 = vld [vmem:[#allocation2 + $0x80] sm:$0xf]
    %v77 = vld [vmem:[#allocation2 + $0x84] sm:$0xf]
    %v78 = vld [vmem:[#allocation2 + $0x88] sm:$0xf]
    %v79 = vld [vmem:[#allocation2 + $0x8c] sm:$0xf]
    %v80 = vld [vmem:[#allocation2 + $0x90] sm:$0xf]
    %v81 = vld [vmem:[#allocation2 + $0x94] sm:$0xf]
    %v82 = vld [vmem:[#allocation2 + $0x98] sm:$0xf]
    %v83 = vld [vmem:[#allocation2 + $0x9c] sm:$0xf]
    %v84 = vld [vmem:[#allocation2 + $0xa0] sm:$0xf]
    %v85 = vld [vmem:[#allocation2 + $0xa4] sm:$0xf]
    %v86 = vld [vmem:[#allocation2 + $0xa8] sm:$0xf]
    %v87 = vld [vmem:[#allocation2 + $0xac] sm:$0xf]
    %v88 = vld [vmem:[#allocation2 + $0xb0] sm:$0xf]
    %v89 = vld [vmem:[#allocation2 + $0xb4] sm:$0xf]
    %v90 = vld [vmem:[#allocation2 + $0xb8] sm:$0xf]
    %v91 = vld [vmem:[#allocation2 + $0xbc] sm:$0xf]
    %v92 = vld [vmem:[#allocation2 + $0xc0] sm:$0xf]
    %v93 = vld [vmem:[#allocation2 + $0xc4] sm:$0xf]
    %v94 = vld [vmem:[#allocation2 + $0xc8] sm:$0xf]
    %v95 = vld [vmem:[#allocation2 + $0xcc] sm:$0xf]
    %v96 = vld [vmem:[#allocation2 + $0xd0] sm:$0xf]
    %v97 = vld [vmem:[#allocation2 + $0xd4] sm:$0xf]
    %v98 = vld [vmem:[#allocation2 + $0xd8] sm:$0xf]
    %v99 = vld [vmem:[#allocation2 + $0xdc] sm:$0xf]
    %v100 = vld [vmem:[#allocation2 + $0xe0] sm:$0xf]
    %v101 = vld [vmem:[#allocation2 + $0xe4] sm:$0xf]
    %v102 = vld [vmem:[#allocation2 + $0xe8] sm:$0xf]
    %v103 = vld [vmem:[#allocation2 + $0xec] sm:$0xf]
    %v104 = vld [vmem:[#allocation2 + $0xf0] sm:$0xf]
    %v105 = vld [vmem:[#allocation2 + $0xf4] sm:$0xf]
    %v106 = vld [vmem:[#allocation2 + $0xf8] sm:$0xf]
    %v107 = vld [vmem:[#allocation2 + $0xfc] sm:$0xf]
    %v108 = vld [vmem:[%s2] sm:$0x1]
    %v173 = vunpack.c.l.b16 %v44
    %v174 = vunpack.c.l.b16 %v45
    %v175 = vunpack.c.l.b16 %v46
    %v176 = vunpack.c.l.b16 %v47
    %v177 = vunpack.c.l.b16 %v48
    %v178 = vunpack.c.l.b16 %v49
    %v179 = vunpack.c.l.b16 %v50
    %v180 = vunpack.c.l.b16 %v51
    %v181 = vunpack.c.l.b16 %v52
    %v182 = vunpack.c.l.b16 %v53
    %v183 = vunpack.c.l.b16 %v54
    %v184 = vunpack.c.l.b16 %v55
    %v185 = vunpack.c.l.b16 %v56
    %v186 = vunpack.c.l.b16 %v57
    %v187 = vunpack.c.l.b16 %v58
    %v188 = vunpack.c.l.b16 %v59
    %v189 = vunpack.c.l.b16 %v60
    %v190 = vunpack.c.l.b16 %v61
    %v191 = vunpack.c.l.b16 %v62
    %v192 = vunpack.c.l.b16 %v63
    %v193 = vunpack.c.l.b16 %v64
    %v194 = vunpack.c.l.b16 %v65
    %v195 = vunpack.c.l.b16 %v66
    %v196 = vunpack.c.l.b16 %v67
    %v197 = vunpack.c.l.b16 %v68
    %v198 = vunpack.c.l.b16 %v69
    %v199 = vunpack.c.l.b16 %v70
    %v200 = vunpack.c.l.b16 %v71
    %v201 = vunpack.c.l.b16 %v72
    %v202 = vunpack.c.l.b16 %v73
    %v203 = vunpack.c.l.b16 %v74
    %v204 = vunpack.c.l.b16 %v75
    %v205 = vunpack.c.l.b16 %v76
    %v206 = vunpack.c.l.b16 %v77
    %v207 = vunpack.c.l.b16 %v78
    %v208 = vunpack.c.l.b16 %v79
    %v209 = vunpack.c.l.b16 %v80
    %v210 = vunpack.c.l.b16 %v81
    %v211 = vunpack.c.l.b16 %v82
    %v212 = vunpack.c.l.b16 %v83
    %v213 = vunpack.c.l.b16 %v84
    %v214 = vunpack.c.l.b16 %v85
    %v215 = vunpack.c.l.b16 %v86
    %v216 = vunpack.c.l.b16 %v87
    %v217 = vunpack.c.l.b16 %v88
    %v218 = vunpack.c.l.b16 %v89
    %v219 = vunpack.c.l.b16 %v90
    %v220 = vunpack.c.l.b16 %v91
    %v221 = vunpack.c.l.b16 %v92
    %v222 = vunpack.c.l.b16 %v93
    %v223 = vunpack.c.l.b16 %v94
    %v224 = vunpack.c.l.b16 %v95
    %v225 = vunpack.c.l.b16 %v96
    %v226 = vunpack.c.l.b16 %v97
    %v227 = vunpack.c.l.b16 %v98
    %v228 = vunpack.c.l.b16 %v99
    %v229 = vunpack.c.l.b16 %v100
    %v230 = vunpack.c.l.b16 %v101
    %v231 = vunpack.c.l.b16 %v102
    %v232 = vunpack.c.l.b16 %v103
    %v233 = vunpack.c.l.b16 %v104
    %v234 = vunpack.c.l.b16 %v105
    %v235 = vunpack.c.l.b16 %v106
    %v236 = vunpack.c.l.b16 %v107
    %v237 = vpack.c.b16 %v174, %v173
    %v238 = vpack.c.b16 %v176, %v175
    %v239 = vpack.c.b16 %v178, %v177
    %v240 = vpack.c.b16 %v180, %v179
    %v241 = vpack.c.b16 %v182, %v181
    %v242 = vpack.c.b16 %v184, %v183
    %v243 = vpack.c.b16 %v186, %v185
    %v244 = vpack.c.b16 %v188, %v187
    %v245 = vpack.c.b16 %v190, %v189
    %v246 = vpack.c.b16 %v192, %v191
    %v247 = vpack.c.b16 %v194, %v193
    %v248 = vpack.c.b16 %v196, %v195
    %v249 = vpack.c.b16 %v198, %v197
    %v250 = vpack.c.b16 %v200, %v199
    %v251 = vpack.c.b16 %v202, %v201
    %v252 = vpack.c.b16 %v204, %v203
    %v253 = vpack.c.b16 %v206, %v205
    %v254 = vpack.c.b16 %v208, %v207
    %v255 = vpack.c.b16 %v210, %v209
    %v256 = vpack.c.b16 %v212, %v211
    %v257 = vpack.c.b16 %v214, %v213
    %v258 = vpack.c.b16 %v216, %v215
    %v259 = vpack.c.b16 %v218, %v217
    %v260 = vpack.c.b16 %v220, %v219
    %v261 = vpack.c.b16 %v222, %v221
    %v262 = vpack.c.b16 %v224, %v223
    %v263 = vpack.c.b16 %v226, %v225
    %v264 = vpack.c.b16 %v228, %v227
    %v265 = vpack.c.b16 %v230, %v229
    %v266 = vpack.c.b16 %v232, %v231
    %v267 = vpack.c.b16 %v234, %v233
    %v268 = vpack.c.b16 %v236, %v235
    %301 = vmatpush.bf16.msra.mxu0 %v244
    %302 = vmatpush.bf16.msra.mxu0 %v243
    %303 = vmatpush.bf16.msra.mxu0 %v242
    %304 = vmatpush.bf16.msra.mxu0 %v241
    %305 = vmatpush.bf16.msra.mxu0 %v240
    %306 = vmatpush.bf16.msra.mxu0 %v239
    %307 = vmatpush.bf16.msra.mxu0 %v238
    %308 = vmatpush.bf16.msra.mxu0 %v237
    %309 = vmatmul.bf16.gmra.mxu0 %v40
    %v310 = vpop.f32.mrf.mxu0
    %v311 = vadd.f32 %v108, %v310
    %v312 = vpop.f32.mrf.mxu0
    %313 = vdwg.mxu0
    %314 = vmatpush.bf16.msra.mxu0 %v252
    %315 = vmatpush.bf16.msra.mxu0 %v251
    %316 = vmatpush.bf16.msra.mxu0 %v250
    %317 = vmatpush.bf16.msra.mxu0 %v249
    %318 = vmatpush.bf16.msra.mxu0 %v248
    %319 = vmatpush.bf16.msra.mxu0 %v247
    %320 = vmatpush.bf16.msra.mxu0 %v246
    %321 = vmatpush.bf16.msra.mxu0 %v245
    %322 = vmatmul.bf16.gmra.mxu0 %v41
    %v323 = vpop.f32.mrf.mxu0
    %v324 = vadd.f32 %v311, %v323
    %v325 = vpop.f32.mrf.mxu0
    %326 = vdwg.mxu0
    %327 = vmatpush.bf16.msra.mxu0 %v260
    %328 = vmatpush.bf16.msra.mxu0 %v259
    %329 = vmatpush.bf16.msra.mxu0 %v258
    %330 = vmatpush.bf16.msra.mxu0 %v257
    %331 = vmatpush.bf16.msra.mxu0 %v256
    %332 = vmatpush.bf16.msra.mxu0 %v255
    %333 = vmatpush.bf16.msra.mxu0 %v254
    %334 = vmatpush.bf16.msra.mxu0 %v253
    %335 = vmatmul.bf16.gmra.mxu0 %v42
    %v336 = vpop.f32.mrf.mxu0
    %v337 = vadd.f32 %v324, %v336
    %v338 = vpop.f32.mrf.mxu0
    %339 = vdwg.mxu0
    %340 = vmatpush.bf16.msra.mxu0 %v268
    %341 = vmatpush.bf16.msra.mxu0 %v267
    %342 = vmatpush.bf16.msra.mxu0 %v266
    %343 = vmatpush.bf16.msra.mxu0 %v265
    %344 = vmatpush.bf16.msra.mxu0 %v264
    %345 = vmatpush.bf16.msra.mxu0 %v263
    %346 = vmatpush.bf16.msra.mxu0 %v262
    %347 = vmatpush.bf16.msra.mxu0 %v261
    %348 = vmatmul.bf16.gmra.mxu0 %v43
    %v349 = vpop.f32.mrf.mxu0
    %v350 = vadd.f32 %v337, %v349
    %v351 = vpop.f32.mrf.mxu0
    %352 = vdwg.mxu0
    %vm353 = vcmp.gt.f32.partialorder %v350, 20.0
    %v354 = vmin.f32 %v350, 20.0
    %v355 = vmul.f32 %v354, 1.442695
    %v356 = vpow.pop %v355
    %v357 = vadd.f32 %v356, 1.0
    %v358 = vlog2.pop %v357
    %v359 = vmul.f32 %v358, 0.6931472
    %v360 = vmul.f32 -0.5, %v356
    %v361 = vadd.f32 %v360, 1.0
    %v362 = vmul.f32 %v361, %v356
    %v363 = vand.u32 2147483647, %v356
    %vm364 = vcmp.lt.f32.partialorder %v363, 0.0004427343
    %v365 = vsel %vm364, %v362, %v359
    %v366 = vsel %vm353, %v350, %v365
    %v367 = vadd.f32 %v366, 0.001
    %368 = vst [vmem:[%s3] sm:$0x1] %v367
    // Predicated region
    $region18: #{beta_policy_forward.1} parent=1 // pred_check
      _
    $region19: #{beta_policy_forward.1} parent=1 // pred_check_branch
      %370 = sbr.rel (0) target = $region21
    $region20: #{beta_policy_forward.1} parent=1 // pred_region
      _
    $region21: #{beta_policy_forward.1} parent=1 // pred_fallthru
      _
    // Predicated region
    $region22: #{beta_policy_forward.1} parent=1 // pred_check
      _
    $region23: #{beta_policy_forward.1} parent=1 // pred_check_branch
      %372 = sbr.rel (0) target = $region25
    $region24: #{beta_policy_forward.1} parent=1 // pred_region
      _
    $region25: #{beta_policy_forward.1} parent=1 // pred_fallthru
      _
    %373 = vsyncpa [#allocation3], 1

</llo_original>
